<compile_context>
chip_gen: v6e
topology: v6e:2x2x1
jax: 0.10.0
libtpu: 0.0.40
codegen_flags: <defaults>
</compile_context>

<pallas_src>
import jax
import jax.numpy as jnp
from jax.experimental import pallas as pl
from jax.experimental.pallas import tpu as pltpu


def _round_up(x, m):
    return (x + m - 1) // m * m


def _discriminator_kernel(ws_ref, h_ref, ha_ref, b_ref, out_ref):
    """One (TN, D) row tile.

    sc_k[n] = sum_j x_k[n, j] * ws[j] + b      with ws = s @ W^T (precomputed)
    out[:, 0] = sc_1 (from h),  out[:, 1] = sc_2 (from h_a)
    """
    ws = ws_ref[...].astype(jnp.float32)            # (1, D), same block every step
    b = b_ref[0, 0]                                 # scalar from SMEM (scalar path)

    h = h_ref[...].astype(jnp.float32)              # (TN, D) (upcast if bf16-streamed)
    ha = ha_ref[...].astype(jnp.float32)            # (TN, D)

    sc1 = jnp.sum(h * ws, axis=-1, keepdims=True) + b     # (TN, 1)
    sc2 = jnp.sum(ha * ws, axis=-1, keepdims=True) + b    # (TN, 1)

    # Direct sub-slice stores; output last dim (2) equals full array dim.
    out_ref[:, 0:1] = sc1
    out_ref[:, 1:2] = sc2


def _choose_block_rows(n, d, bytes_per_elem, stream_budget_bytes=24 << 20):
    # Double-buffered h and h_a tiles dominate VMEM:
    #   2 streams * 2 buffers * TN * D * bpe  <= stream_budget_bytes
    tn = stream_budget_bytes // (4 * d * bytes_per_elem)
    tn = max(8, (tn // 8) * 8)                 # sublane multiple of 8
    return min(tn, _round_up(n, 8))


def discriminator_forward(s, h, h_a, w, b, s_bias1=None, s_bias2=None,
                          stream_dtype=None, block_rows=None):
    """Pallas forward.

    s: (1, D), h/h_a: (N, D), w: (D, D) [out-feature dim squeezed], b: (1, 1)
    Returns logits (N, 2) = [sc_1 | sc_2], matching nn.Bilinear semantics.
    """
    N, D = h.shape

    # Hoist the tiny matvec out of the hot loop: ws[i] = sum_j W[i, j] * s[j].
    ws = (s.astype(jnp.float32) @ w.astype(jnp.float32).T)          # (1, D)
    b = b.astype(jnp.float32).reshape(1, 1)

    # Optional bandwidth optimization: stream the big arrays in bf16.
    if stream_dtype is not None:
        h = h.astype(stream_dtype)
        h_a = h_a.astype(stream_dtype)

    in_bpe = jnp.dtype(h.dtype).itemsize
    tn = block_rows if block_rows is not None else _choose_block_rows(N, D, in_bpe)
    grid = (pl.cdiv(N, tn),)

    # Explicit VMEM budget (headroom for padded lanes / internal scratch).
    stream_bytes = 4 * tn * D * in_bpe            # h + h_a, double-buffered
    out_bytes = 2 * tn * 2 * 4                    # output tiles, double-buffered
    ws_bytes = 2 * max(D, 128) * 4
    vmem_limit = min(max(stream_bytes + out_bytes + ws_bytes + (4 << 20), 32 << 20),
                     56 << 20)

    logits = pl.pallas_call(
        _discriminator_kernel,
        out_shape=jax.ShapeDtypeStruct((N, 2), jnp.float32),
        grid=grid,
        in_specs=[
            pl.BlockSpec((1, D), lambda i: (0, 0)),                     # ws (resident)
            pl.BlockSpec((tn, D), lambda i: (i, 0)),                    # h row tile
            pl.BlockSpec((tn, D), lambda i: (i, 0)),                    # h_a row tile
            pl.BlockSpec(memory_space=pltpu.MemorySpace.SMEM),          # bias scalar
        ],
        out_specs=pl.BlockSpec((tn, 2), lambda i: (i, 0)),
        compiler_params=pltpu.CompilerParams(
            dimension_semantics=("parallel",),      # shard row stream over v7x's 2 TCs
            vmem_limit_bytes=int(vmem_limit),
        ),
    )(ws, h, h_a, b)

    # Optional additive biases (reference default passes None) — plain-JAX glue.
    if s_bias1 is not None:
        logits = logits.at[:, 0:1].add(s_bias1)
    if s_bias2 is not None:
        logits = logits.at[:, 1:2].add(s_bias2)
    return logits


def init_params(key, n_hidden):
    """Deterministic init matching the module: xavier_uniform_ weight, zero bias."""
    # nn.Bilinear weight has shape (1, D, D); xavier_uniform fan_in = D*D,
    # fan_out = 1*D  => bound = sqrt(6 / (D*D + D)).
    bound = (6.0 / (n_hidden * n_hidden + n_hidden)) ** 0.5
    w = jax.random.uniform(key, (n_hidden, n_hidden), jnp.float32,
                           minval=-bound, maxval=bound)
    b = jnp.zeros((1, 1), jnp.float32)
    return w, b


if __name__ == "__main__":
    D = 32   # n_hidden_layers
    N = 8    # number of nodes / rows in h, h_a

    key = jax.random.PRNGKey(0)
    kw, ks, kh, kha = jax.random.split(key, 4)

    w, b = init_params(kw, D)
    s = jax.random.normal(ks, (1, D), jnp.float32)     # summary vector
    h = jax.random.normal(kh, (N, D), jnp.float32)     # embeddings
    h_a = jax.random.normal(kha, (N, D), jnp.float32)  # augmented embeddings

    logits = discriminator_forward(s, h, h_a, w, b)
    jax.block_until_ready(logits)

    # Sanity check against a plain-JAX reference of nn.Bilinear semantics.
    ws_ref = s @ w.T                                   # (1, D)
    ref = jnp.concatenate(
        [jnp.sum(h * ws_ref, axis=-1, keepdims=True) + b[0, 0],
         jnp.sum(h_a * ws_ref, axis=-1, keepdims=True) + b[0, 0]],
        axis=1)
    assert logits.shape == (N, 2)
    assert jnp.allclose(logits, ref, atol=1e-5, rtol=1e-5)

    print("KERNEL_OK")
</pallas_src>

<mosaic_0001>
module attributes {stable_mosaic.version = 11 : i64} {
  func.func @_discriminator_kernel(%arg0: i32, %arg1: memref<1x32xf32, #tpu.memory_space<vmem>>, %arg2: memref<8x32xf32, #tpu.memory_space<vmem>>, %arg3: memref<8x32xf32, #tpu.memory_space<vmem>>, %arg4: memref<1x1xf32, #tpu.memory_space<smem>>, %arg5: memref<8x2xf32, #tpu.memory_space<vmem>>) attributes {dimension_semantics = [#tpu.dimension_semantics<parallel>], iteration_bounds = array<i64: 1>, scalar_prefetch = 0 : i64, scratch_operands = 0 : i64, tpu.core_type = #tpu.core_type<tc>, window_params = [{pipeline_mode = #tpu.pipeline_mode<synchronous>, transform_indices = @transform_0, window_bounds = array<i64: 1, 32>}, {transform_indices = @transform_1, window_bounds = array<i64: 8, 32>}, {transform_indices = @transform_2, window_bounds = array<i64: 8, 32>}, {transform_indices = @transform_3, window_bounds = array<i64: 1, 1>}, {transform_indices = @transform_4, window_bounds = array<i64: 8, 2>}]} {
    %c0 = arith.constant 0 : index
    %c0_0 = arith.constant 0 : index
    %0 = vector.load %arg1[%c0, %c0_0] : memref<1x32xf32, #tpu.memory_space<vmem>>, vector<1x32xf32>
    %c0_1 = arith.constant 0 : index
    %c0_2 = arith.constant 0 : index
    %1 = memref.load %arg4[%c0_1, %c0_2] : memref<1x1xf32, #tpu.memory_space<smem>>
    %c0_3 = arith.constant 0 : index
    %c0_4 = arith.constant 0 : index
    %2 = vector.load %arg2[%c0_3, %c0_4] : memref<8x32xf32, #tpu.memory_space<vmem>>, vector<8x32xf32>
    %c0_5 = arith.constant 0 : index
    %c0_6 = arith.constant 0 : index
    %3 = vector.load %arg3[%c0_5, %c0_6] : memref<8x32xf32, #tpu.memory_space<vmem>>, vector<8x32xf32>
    %4 = vector.broadcast %0 : vector<1x32xf32> to vector<8x32xf32>
    %5 = arith.mulf %2, %4 : vector<8x32xf32>
    %cst = arith.constant dense<0.000000e+00> : vector<8xf32>
    %6 = vector.multi_reduction <add>, %5, %cst [1] : vector<8x32xf32> to vector<8xf32>
    %7 = vector.shape_cast %6 : vector<8xf32> to vector<8x1xf32>
    %8 = vector.broadcast %1 : f32 to vector<8x1xf32>
    %9 = arith.addf %7, %8 : vector<8x1xf32>
    %10 = vector.broadcast %0 : vector<1x32xf32> to vector<8x32xf32>
    %11 = arith.mulf %3, %10 : vector<8x32xf32>
    %cst_7 = arith.constant dense<0.000000e+00> : vector<8xf32>
    %12 = vector.multi_reduction <add>, %11, %cst_7 [1] : vector<8x32xf32> to vector<8xf32>
    %13 = vector.shape_cast %12 : vector<8xf32> to vector<8x1xf32>
    %14 = vector.broadcast %1 : f32 to vector<8x1xf32>
    %15 = arith.addf %13, %14 : vector<8x1xf32>
    %c0_8 = arith.constant 0 : index
    %c0_9 = arith.constant 0 : index
    %16 = vector.load %arg5[%c0_8, %c0_9] : memref<8x2xf32, #tpu.memory_space<vmem>>, vector<8x1xf32>
    tpu.vector_store %arg5[%c0_8, %c0_9], %9 {strides = array<i32>} : memref<8x2xf32, #tpu.memory_space<vmem>>, vector<8x1xf32>,
    %c0_10 = arith.constant 0 : index
    %c1 = arith.constant 1 : index
    %17 = vector.load %arg5[%c0_10, %c1] : memref<8x2xf32, #tpu.memory_space<vmem>>, vector<8x1xf32>
    tpu.vector_store %arg5[%c0_10, %c1], %15 {strides = array<i32>} : memref<8x2xf32, #tpu.memory_space<vmem>>, vector<8x1xf32>,
    return
  }
  func.func @transform_0(%arg0: i32) -> (i32, i32) {
    %c0_i32 = arith.constant 0 : i32
    %c0_i32_0 = arith.constant 0 : i32
    %c0_i32_1 = arith.constant 0 : i32
    return %c0_i32, %c0_i32_0 : i32, i32
  }
  func.func @transform_1(%arg0: i32) -> (i32, i32) {
    %c0_i32 = arith.constant 0 : i32
    %c0_i32_0 = arith.constant 0 : i32
    return %arg0, %c0_i32 : i32, i32
  }
  func.func @transform_2(%arg0: i32) -> (i32, i32) {
    %c0_i32 = arith.constant 0 : i32
    %c0_i32_0 = arith.constant 0 : i32
    return %arg0, %c0_i32 : i32, i32
  }
  func.func @transform_3(%arg0: i32) -> (i32, i32) {
    %c0_i32 = arith.constant 0 : i32
    %c0_i32_0 = arith.constant 0 : i32
    %c0_i32_1 = arith.constant 0 : i32
    return %c0_i32, %c0_i32_0 : i32, i32
  }
  func.func @transform_4(%arg0: i32) -> (i32, i32) {
    %c0_i32 = arith.constant 0 : i32
    %c0_i32_0 = arith.constant 0 : i32
    return %arg0, %c0_i32 : i32, i32
  }
}

</mosaic_0001>

<llo_original>
// kernel: tpu_custom_call.1
$region0: #{tpu_custom_call.1}
  #allocation0 [shape = 'u32[]', space=smem, size = 0x4, offset = 0x4, fixed_abs, tag = 'smem constant byte address 0x4 - core index']
  #allocation1 [shape = 'u32[144,128]{1,0:T(1,128)}', space=vmem, size = 0x12000, scoped, tag = 'internal scratch']
  #allocation2 [shape = 'f32[1,1]{1,0:T(1,128)S(6)}', space=smem, size = 0x200, scoped, tag = 'scoped memory for tpu_custom_call.1']
  %s0 = inlined_call_operand.vmem [shape: f32[1,32], index: 0, kind: input, shape index: {}]
  %s1 = inlined_call_operand.hbm [shape: f32[8,32], index: 1, kind: input, shape index: {}]
  %s2 = inlined_call_operand.hbm [shape: f32[8,32], index: 2, kind: input, shape index: {}]
  %s3 = inlined_call_operand.<no memory space> [shape: f32[1,1], index: 3, kind: input, shape index: {}]
  %s4 = inlined_call_operand.vmem [shape: f32[8,2], index: 4, kind: output, shape index: {}]
  %s5 = sld [smem:[#allocation0]]
  $region34: #{tpu_custom_call.1} parent=0
    _
  %s7 = ssub.s32 1, %s5
  %s8 = scalar_select 0, %s7, %s5
  %9 = sst [smem:[#allocation2]] %s3
  $region1: #{tpu_custom_call.1} parent=0
    #allocation3 [shape = 'u8[4096]{0}', space=vmem, size = 0x1000, scoped, tag = 'input window, operand 1, single buffered']
    #allocation4 [shape = 's32[1]{0}', space=sflag, size = 0x4, scoped, tag = 'scoped memory for tpu_custom_call.1']
    #allocation5 [shape = 'u8[4096]{0}', space=vmem, size = 0x1000, scoped, tag = 'input window, operand 2, single buffered']
    #allocation6 [shape = 's32[1]{0}', space=sflag, size = 0x4, scoped, tag = 'scoped memory for tpu_custom_call.1']
    %10 = vsyncpa [#allocation4], 0
    %11 = vsyncpa [#allocation6], 0
    // Predicated region
    $region2: #{tpu_custom_call.1} parent=1 // pred_check
      _
    $region3: #{tpu_custom_call.1} parent=1 // pred_check_branch
      %13 = sbr.rel (0) target = $region5
    $region4: #{tpu_custom_call.1} parent=1 // pred_region
      _
    $region5: #{tpu_custom_call.1} parent=1 // pred_fallthru
      _
    // Predicated region
    $region6: #{tpu_custom_call.1} parent=1 // pred_check
      _
    $region7: #{tpu_custom_call.1} parent=1 // pred_check_branch
      %15 = sbr.rel (0) target = $region9
    $region8: #{tpu_custom_call.1} parent=1 // pred_region
      %s17 = ssub.s32 128, 128
      %18 = vsyncadd [#allocation4], %s17
      %s20 = sshll.u32 [#allocation3], 4
      %s21 = int_to_ptr.vmem [resolvable:$true] %s20
      %23 = dma.hbm_to_vmem [thread:$0]  %s1, 128, %s21, [#allocation4]
    $region9: #{tpu_custom_call.1} parent=1 // pred_fallthru
      _
    // Predicated region
    $region10: #{tpu_custom_call.1} parent=1 // pred_check
      _
    $region11: #{tpu_custom_call.1} parent=1 // pred_check_branch
      %25 = sbr.rel (0) target = $region13
    $region12: #{tpu_custom_call.1} parent=1 // pred_region
      %s27 = ssub.s32 128, 128
      %28 = vsyncadd [#allocation6], %s27
      %s30 = sshll.u32 [#allocation5], 4
      %s31 = int_to_ptr.vmem [resolvable:$true] %s30
      %33 = dma.hbm_to_vmem [thread:$0]  %s2, 128, %s31, [#allocation6]
    $region13: #{tpu_custom_call.1} parent=1 // pred_fallthru
      _
    // Predicated region
    $region14: #{tpu_custom_call.1} parent=1 // pred_check
      _
    $region15: #{tpu_custom_call.1} parent=1 // pred_check_branch
      %35 = sbr.rel (0) target = $region17
    $region16: #{tpu_custom_call.1} parent=1 // pred_region
      _
    $region17: #{tpu_custom_call.1} parent=1 // pred_fallthru
      _
    // Predicated region
    $region18: #{tpu_custom_call.1} parent=1 // pred_check
      _
    $region19: #{tpu_custom_call.1} parent=1 // pred_check_branch
      %37 = sbr.rel (0) target = $region21
    $region20: #{tpu_custom_call.1} parent=1 // pred_region
      %38 = dma.done [#allocation4], 128
    $region21: #{tpu_custom_call.1} parent=1 // pred_fallthru
      _
    // Predicated region
    $region22: #{tpu_custom_call.1} parent=1 // pred_check
      _
    $region23: #{tpu_custom_call.1} parent=1 // pred_check_branch
      %40 = sbr.rel (0) target = $region25
    $region24: #{tpu_custom_call.1} parent=1 // pred_region
      %41 = dma.done [#allocation6], 128
    $region25: #{tpu_custom_call.1} parent=1 // pred_fallthru
      _
    %v42 = vld [vmem:[%s0] sm:$0x1]
    %s43 = sld [smem:[#allocation2]]
    %v44 = vld [vmem:[#allocation3] sm:$0xff]
    %v45 = vld [vmem:[#allocation5] sm:$0xff]
    %v47 = vlaneseq
    %v48 = vshrl.u32 %v47, 7
    %v49 = vsub.s32 0, %v48
    %v50 = vrot.slane %v42, %v49
    %v52 = vmul.f32 %v44, %v50
    %vm53 = vcmask 261120
    %v54 = vsel %vm53, %v52, 0.0
    %55 = vadd.xlane.f32.xlu0 %v54
    %v56 = vpop.xlane.xlu0 %55
    %v57 = vstv %s43
    %v58 = vadd.f32 %v56, %v57
    %v59 = vmul.f32 %v45, %v50
    %v60 = vsel %vm53, %v59, 0.0
    %61 = vadd.xlane.f32.xlu0 %v60
    %v62 = vpop.xlane.xlu0 %61
    %v63 = vadd.f32 %v62, %v57
    %vm64 = vcmask 7168
    %65 = vst.msk [vmem:[%s4] sm:$0xff] %vm64, %v58
    %vm66 = vcmask 15368
    %67 = vst.msk [vmem:[%s4] sm:$0xff] %vm66, %v63
    // Predicated region
    $region26: #{tpu_custom_call.1} parent=1 // pred_check
      _
    $region27: #{tpu_custom_call.1} parent=1 // pred_check_branch
      %69 = sbr.rel (0) target = $region29
    $region28: #{tpu_custom_call.1} parent=1 // pred_region
      _
    $region29: #{tpu_custom_call.1} parent=1 // pred_fallthru
      _
    // Predicated region
    $region30: #{tpu_custom_call.1} parent=1 // pred_check
      _
    $region31: #{tpu_custom_call.1} parent=1 // pred_check_branch
      %71 = sbr.rel (0) target = $region33
    $region32: #{tpu_custom_call.1} parent=1 // pred_region
      _
    $region33: #{tpu_custom_call.1} parent=1 // pred_fallthru
      _
    %72 = vsyncpa [#allocation4], 1
    %73 = vsyncpa [#allocation6], 1

</llo_original>
